<compile_context>
chip_gen: v5e
topology: v5e:2x2
jax: 0.10.0
libtpu: 0.0.40
codegen_flags: <defaults>
</compile_context>

<pallas_src>
import functools

import jax
import jax.numpy as jnp
import numpy as np
from jax import lax
from jax.experimental import pallas as pl
from jax.experimental.pallas import tpu as pltpu


def _round_up(x, m):
    return ((x + m - 1) // m) * m


def _pick_tile(dim, candidates):
    for c in candidates:
        if dim % c == 0:
            return c
    return dim


# --------------------------------------------------------------------------
# Stage 1: feature transform  H = X @ W   (standard tiled MXU matmul)
# --------------------------------------------------------------------------
def _matmul_kernel(x_ref, w_ref, o_ref, acc_ref):
    @pl.when(pl.program_id(2) == 0)
    def _():
        acc_ref[...] = jnp.zeros_like(acc_ref)

    acc_ref[...] += jnp.dot(x_ref[...], w_ref[...],
                            preferred_element_type=jnp.float32)

    @pl.when(pl.program_id(2) == pl.num_programs(2) - 1)
    def _():
        o_ref[...] = acc_ref[...]


def matmul_xw(x, w):
    """x: (M, K) f32, w: (K, N) f32, all dims already padded to multiples of 128."""
    m, k = x.shape
    _, n = w.shape
    tm = _pick_tile(m, (512, 256, 128))
    tn = _pick_tile(n, (512, 256, 128))
    tk = _pick_tile(k, (512, 256, 128))
    return pl.pallas_call(
        _matmul_kernel,
        out_shape=jax.ShapeDtypeStruct((m, n), jnp.float32),
        grid_spec=pltpu.PrefetchScalarGridSpec(
            num_scalar_prefetch=0,
            grid=(m // tm, n // tn, k // tk),
            in_specs=[
                pl.BlockSpec((tm, tk), lambda i, j, kk: (i, kk)),
                pl.BlockSpec((tk, tn), lambda i, j, kk: (kk, j)),
            ],
            out_specs=pl.BlockSpec((tm, tn), lambda i, j, kk: (i, j)),
            scratch_shapes=[pltpu.VMEM((tm, tn), jnp.float32)],
        ),
        compiler_params=pltpu.CompilerParams(
            dimension_semantics=("parallel", "parallel", "arbitrary")),
    )(x, w)


# --------------------------------------------------------------------------
# Stage 2: median aggregation + bias + optional ReLU
# --------------------------------------------------------------------------
def _median_agg_kernel(cand_ref, adj_ref, k_ref, h_ref, b_ref, o_ref, *,
                       max_cand, ft, apply_relu, unroll):
    """One (feature-block, dst-tile) grid cell.

    cand_ref: (n_tiles*max_cand,) i32 SMEM  per-dst-tile candidate source indices
    adj_ref:  (TD, NS)  bf16  rows of A for this dst tile (A[i, j] = 1 iff edge j -> i)
    k_ref:    (TD, 1)   f32   1-indexed lower-median rank per dst node (>= 1)
    h_ref:    (NS, FT)  f32   H = X @ W, this feature block (resident across dst tiles)
    b_ref:    (1, FT)   f32   bias slice
    o_ref:    (TD, FT)  f32   output slab
    """
    di = pl.program_id(1)          # dst-tile index = inner grid axis
    base = di * max_cand

    # Hoisted loads (once per grid cell, not per candidate).
    a_bf = adj_ref[...]            # (TD, NS) bf16 0/1 — already bf16 in HBM, no cast
    h = h_ref[...]                 # (NS, FT) f32
    kcol = k_ref[...]              # (TD, 1)  f32

    # For candidate source node j:
    #   cnt[i, f] = #{in-nbrs j' of i : H[j', f] <= H[j, f]}  (one MXU matmul)
    #   accept iff cnt >= k[i]; every accepted value is >= the k-th smallest
    #   neighbour value and that value itself is accepted, so the running min
    #   over candidates is exactly the lower median.  Two candidates per
    #   iteration share one (TD,NS)@(NS,2*FT) matmul to fill the 256-wide MXU.
    def body(c, med):
        j0 = cand_ref[base + 2 * c]
        j1 = cand_ref[base + 2 * c + 1]
        hj0 = h_ref[pl.ds(j0, 1), :]                             # (1, FT)
        hj1 = h_ref[pl.ds(j1, 1), :]                             # (1, FT)
        le = jnp.concatenate([(h <= hj0).astype(jnp.bfloat16),
                              (h <= hj1).astype(jnp.bfloat16)],
                             axis=-1)                            # (NS, 2*FT) 0/1
        cnt = jnp.dot(a_bf, le, preferred_element_type=jnp.float32)  # (TD, 2*FT)
        c0 = jnp.where(cnt[:, :ft] >= kcol, hj0, jnp.inf)        # (TD, FT)
        c1 = jnp.where(cnt[:, ft:] >= kcol, hj1, jnp.inf)        # (TD, FT)
        return jnp.minimum(med, jnp.minimum(c0, c1))

    med = lax.fori_loop(
        0, max_cand // 2, body,
        jnp.full(o_ref.shape, jnp.inf, dtype=jnp.float32),
        unroll=unroll)

    out = med + b_ref[...]
    if apply_relu:
        out = jnp.maximum(out, 0.0)
    o_ref[...] = out    # single lane-dense (TD, FT) slab store


def modified_conv_layer(x, w, b, adj_pad, k_pad, cand_flat, max_cand, *,
                        apply_relu):
    """One ModifiedConv layer. x: (N, Fin) unpadded; returns (N, Fout) unpadded."""
    n = x.shape[0]
    fin, fout = w.shape
    n_pad = adj_pad.shape[0]
    fin_pad = _round_up(fin, 128)
    fout_pad = _round_up(fout, 128)
    td = 128
    ft = 256 if fout_pad % 256 == 0 else 128   # fill the 256-wide MXU when possible

    # Zero-pad to lane/sublane-friendly shapes (exact: padded src rows contribute 0
    # via zero adjacency columns; padded feature columns are sliced at the end).
    x_p = jnp.zeros((n_pad, fin_pad), jnp.float32).at[:n, :fin].set(x)
    w_p = jnp.zeros((fin_pad, fout_pad), jnp.float32).at[:fin, :fout].set(w)
    b_p = jnp.zeros((1, fout_pad), jnp.float32).at[0, :fout].set(b)

    h = matmul_xw(x_p, w_p)                      # (n_pad, fout_pad) f32

    # Grid: feature blocks OUTER, dst tiles INNER -> the (n_pad, ft) H block (index
    # depends only on fi) stays VMEM-resident across the inner dst loop.
    grid = (fout_pad // ft, n_pad // td)

    # Explicit VMEM budget from the actual per-cell block footprint (<= 64 MiB so the
    # limit is valid on v7x; raises v5e's 16 MiB scoped default when needed).
    vmem_est = (2 * n_pad * ft * 4          # H block, double-buffered (f32)
                + 2 * td * n_pad * 2        # adjacency tile, double-buffered (bf16)
                + 2 * td * 4 + 2 * ft * 4   # k column + bias slice
                + 2 * td * ft * 4           # output slab
                + n_pad * 2 * ft * 2        # (NS, 2*FT) bf16 mask temp
                + n_pad * ft * 4            # resident H value
                + 8 * td * ft * 4)          # misc f32 temps (cnt / cand / med)
    vmem_limit = int(min(max(vmem_est * 3 // 2, 32 << 20), 64 << 20))

    kernel = functools.partial(_median_agg_kernel, max_cand=max_cand, ft=ft,
                               apply_relu=apply_relu, unroll=4)
    out = pl.pallas_call(
        kernel,
        out_shape=jax.ShapeDtypeStruct((n_pad, fout_pad), jnp.float32),
        grid_spec=pltpu.PrefetchScalarGridSpec(
            num_scalar_prefetch=1,                               # candidate lists -> SMEM
            grid=grid,
            in_specs=[
                pl.BlockSpec((td, n_pad), lambda fi, di, c: (di, 0)),   # adjacency rows
                pl.BlockSpec((td, 1), lambda fi, di, c: (di, 0)),       # median ranks
                pl.BlockSpec((n_pad, ft), lambda fi, di, c: (0, fi)),   # H feature block
                pl.BlockSpec((1, ft), lambda fi, di, c: (0, fi)),       # bias slice
            ],
            out_specs=pl.BlockSpec((td, ft), lambda fi, di, c: (di, fi)),
        ),
        compiler_params=pltpu.CompilerParams(
            dimension_semantics=("parallel", "parallel"),
            vmem_limit_bytes=vmem_limit),
    )(cand_flat, adj_pad, k_pad, h, b_p)
    return out[:n, :fout]


# --------------------------------------------------------------------------
# Graph prep, params, forward, pure-JAX reference
# --------------------------------------------------------------------------
def prepare_graph(adj, *, td=128, pair=2, unroll=4):
    """adj: (N, N) {0,1}, adj[i, j] = 1 iff edge j -> i (row i = in-neighbours).

    Returns bf16 padded adjacency, f32 median ranks, flattened per-dst-tile
    candidate lists (int32, for scalar prefetch), the per-tile candidate count,
    and the real node count.
    """
    adj_np = np.asarray(adj).astype(np.float32)
    n = adj_np.shape[0]
    n_pad = _round_up(n, 128)                    # dst tile is always 128
    n_tiles = n_pad // td

    deg = adj_np.sum(axis=1).astype(np.int64)
    k = np.maximum((deg + 1) // 2, 1).astype(np.float32)   # 1-indexed lower median

    adj_p = np.zeros((n_pad, n_pad), dtype=np.float32)
    adj_p[:n, :n] = adj_np
    k_p = np.ones((n_pad, 1), dtype=np.float32)
    k_p[:n, 0] = k

    # Per-dst-tile candidate lists = union of in-neighbours over the tile's rows.
    lists = []
    for t in range(n_tiles):
        rows = adj_p[t * td:(t + 1) * td]
        lists.append(np.nonzero(rows.any(axis=0))[0].astype(np.int32))
    max_cand = max(1, max(len(l) for l in lists))
    max_cand = _round_up(max_cand, pair * unroll)   # even for pairing, clean unroll
    cand = np.zeros((n_tiles, max_cand), dtype=np.int32)
    for t, l in enumerate(lists):
        if len(l) == 0:
            continue                     # all-zero tile: index-0 fillers are exact-safe
        cand[t, :len(l)] = l
        cand[t, len(l):] = l[-1]         # duplicate candidates are exact-safe (idempotent min)

    return (jnp.asarray(adj_p, dtype=jnp.bfloat16),   # 0/1 exact in bf16
            jnp.asarray(k_p),
            jnp.asarray(cand.reshape(-1)),            # flat 1-D -> compact SMEM padding
            int(max_cand), n)


def init_modified_gcn_params(key, in_feats, n_hidden, n_classes, n_layers):
    """Deterministic xavier_uniform_ weights, zero biases (matches reset_parameters)."""
    dims = ([(in_feats, n_hidden)]
            + [(n_hidden, n_hidden)] * (n_layers - 1)
            + [(n_hidden, n_classes)])
    params = []
    for (fi, fo) in dims:
        key, sub = jax.random.split(key)
        bound = float(np.sqrt(6.0 / (fi + fo)))
        w = jax.random.uniform(sub, (fi, fo), jnp.float32, -bound, bound)
        b = jnp.zeros((fo,), jnp.float32)
        params.append((w, b))
    return params


def modified_gcn_forward(params, adj_pad, k_pad, cand_flat, max_cand, features):
    # self.dropout(h) -> identity in eval mode (deterministic forward).
    h = features
    n_total = len(params)
    for li, (w, b) in enumerate(params):
        apply_relu = li < n_total - 1          # last ModifiedConv has no activation
        h = modified_conv_layer(h, w, b, adj_pad, k_pad, cand_flat, max_cand,
                                apply_relu=apply_relu)
    return h


def reference_forward(params, adj, features):
    """Pure-JAX reference (sort-based masked median) for validation."""
    a = adj.astype(jnp.float32)
    deg = jnp.sum(adj, axis=1)
    idx = (deg + 1) // 2 - 1                   # 0-indexed lower median
    h = features
    for li, (w, b) in enumerate(params):
        hw = jnp.dot(h, w, precision=lax.Precision.HIGHEST)
        masked = jnp.where(a[:, :, None] > 0, hw[None, :, :], jnp.inf)
        s = jnp.sort(masked, axis=1)
        med = jnp.take_along_axis(s, idx[:, None, None], axis=1)[:, 0, :]
        out = med + b[None, :]
        if li < len(params) - 1:
            out = jnp.maximum(out, 0.0)
        h = out
    return h


if __name__ == "__main__":
    N, in_feats, n_hidden, n_classes, n_layers = 16, 8, 32, 4, 2

    key = jax.random.PRNGKey(0)
    k_feat, k_adj, k_par = jax.random.split(key, 3)

    features = jax.random.normal(k_feat, (N, in_feats), dtype=jnp.float32)

    # Random directed graph with self-loops so every node has >= 1 in-neighbour.
    adj = jax.random.bernoulli(k_adj, 0.35, (N, N)).astype(jnp.int32)
    adj = jnp.maximum(adj, jnp.eye(N, dtype=jnp.int32))       # (N_dst, N_src)

    adj_pad, k_pad, cand_flat, max_cand, n_real = prepare_graph(adj)
    params = init_modified_gcn_params(k_par, in_feats, n_hidden, n_classes,
                                      n_layers)

    out = modified_gcn_forward(params, adj_pad, k_pad, cand_flat, max_cand,
                               features)
    out = jax.block_until_ready(out)

    ref = reference_forward(params, adj, features)
    np.testing.assert_allclose(np.asarray(out), np.asarray(ref),
                               rtol=1e-3, atol=1e-3)
    print("KERNEL_OK")
</pallas_src>

<mosaic_0001>
module attributes {stable_mosaic.version = 11 : i64} {
  func.func @_matmul_kernel(%arg0: i32, %arg1: i32, %arg2: i32, %arg3: memref<128x128xf32, #tpu.memory_space<vmem>>, %arg4: memref<128x128xf32, #tpu.memory_space<vmem>>, %arg5: memref<128x128xf32, #tpu.memory_space<vmem>>, %arg6: memref<128x128xf32, #tpu.memory_space<vmem>>) attributes {dimension_semantics = [#tpu.dimension_semantics<parallel>, #tpu.dimension_semantics<parallel>, #tpu.dimension_semantics<arbitrary>], iteration_bounds = array<i64: 1, 1, 1>, scalar_prefetch = 0 : i64, scratch_operands = 1 : i64, tpu.core_type = #tpu.core_type<tc>, window_params = [{transform_indices = @transform_0, window_bounds = array<i64: 128, 128>}, {transform_indices = @transform_1, window_bounds = array<i64: 128, 128>}, {transform_indices = @transform_2, window_bounds = array<i64: 128, 128>}]} {
    %c0_i32 = arith.constant 0 : i32
    %0 = arith.cmpi eq, %arg2, %c0_i32 : i32
    %1 = arith.extui %0 : i1 to i32
    %c0_i32_0 = arith.constant 0 : i32
    %2 = arith.cmpi ne, %1, %c0_i32_0 : i32
    scf.if %2 {
      %cst_10 = arith.constant 0.000000e+00 : f32
      %12 = vector.broadcast %cst_10 : f32 to vector<128x128xf32>
      %c0_11 = arith.constant 0 : index
      %c0_12 = arith.constant 0 : index
      %13 = vector.load %arg6[%c0_11, %c0_12] : memref<128x128xf32, #tpu.memory_space<vmem>>, vector<128x128xf32>
      tpu.vector_store %arg6[%c0_11, %c0_12], %12 {strides = array<i32>} : memref<128x128xf32, #tpu.memory_space<vmem>>, vector<128x128xf32>,
    } else {
    }
    %c0 = arith.constant 0 : index
    %c0_1 = arith.constant 0 : index
    %3 = vector.load %arg6[%c0, %c0_1] : memref<128x128xf32, #tpu.memory_space<vmem>>, vector<128x128xf32>
    %c0_2 = arith.constant 0 : index
    %c0_3 = arith.constant 0 : index
    %4 = vector.load %arg3[%c0_2, %c0_3] : memref<128x128xf32, #tpu.memory_space<vmem>>, vector<128x128xf32>
    %c0_4 = arith.constant 0 : index
    %c0_5 = arith.constant 0 : index
    %5 = vector.load %arg4[%c0_4, %c0_5] : memref<128x128xf32, #tpu.memory_space<vmem>>, vector<128x128xf32>
    %cst = arith.constant dense<0.000000e+00> : vector<128x128xf32>
    %6 = tpu.matmul %4, %5, %cst {dimension_numbers = #tpu.dot_dimension_numbers<[1], [0], [0], [1], [0, 0, 1, 1], [], []>} : vector<128x128xf32>, vector<128x128xf32>, vector<128x128xf32> -> vector<128x128xf32>
    %7 = arith.addf %3, %6 : vector<128x128xf32>
    %c0_6 = arith.constant 0 : index
    %c0_7 = arith.constant 0 : index
    %8 = vector.load %arg6[%c0_6, %c0_7] : memref<128x128xf32, #tpu.memory_space<vmem>>, vector<128x128xf32>
    tpu.vector_store %arg6[%c0_6, %c0_7], %7 {strides = array<i32>} : memref<128x128xf32, #tpu.memory_space<vmem>>, vector<128x128xf32>,
    %c0_i32_8 = arith.constant 0 : i32
    %9 = arith.cmpi eq, %arg2, %c0_i32_8 : i32
    %10 = arith.extui %9 : i1 to i32
    %c0_i32_9 = arith.constant 0 : i32
    %11 = arith.cmpi ne, %10, %c0_i32_9 : i32
    scf.if %11 {
      %c0_10 = arith.constant 0 : index
      %c0_11 = arith.constant 0 : index
      %12 = vector.load %arg6[%c0_10, %c0_11] : memref<128x128xf32, #tpu.memory_space<vmem>>, vector<128x128xf32>
      %c0_12 = arith.constant 0 : index
      %c0_13 = arith.constant 0 : index
      %13 = vector.load %arg5[%c0_12, %c0_13] : memref<128x128xf32, #tpu.memory_space<vmem>>, vector<128x128xf32>
      tpu.vector_store %arg5[%c0_12, %c0_13], %12 {strides = array<i32>} : memref<128x128xf32, #tpu.memory_space<vmem>>, vector<128x128xf32>,
    } else {
    }
    return
  }
  func.func @transform_0(%arg0: i32, %arg1: i32, %arg2: i32) -> (i32, i32) {
    %c0_i32 = arith.constant 0 : i32
    return %arg0, %arg2 : i32, i32
  }
  func.func @transform_1(%arg0: i32, %arg1: i32, %arg2: i32) -> (i32, i32) {
    %c0_i32 = arith.constant 0 : i32
    return %arg2, %arg1 : i32, i32
  }
  func.func @transform_2(%arg0: i32, %arg1: i32, %arg2: i32) -> (i32, i32) {
    %c0_i32 = arith.constant 0 : i32
    return %arg0, %arg1 : i32, i32
  }
}

</mosaic_0001>

<llo_original>
// kernel: tpu_custom_call.1
$region0: #{tpu_custom_call.1}
  #allocation0 [shape = 'u32[]', space=smem, size = 0x4, offset = 0x4, fixed_abs, tag = 'smem constant byte address 0x4 - core index']
  #allocation1 [shape = 'u32[72,128]{1,0:T(1,128)}', space=vmem, size = 0x9000, scoped, tag = 'internal scratch']
  #allocation2 [shape = 'f32[128,128]{1,0:T(8,128)}', space=vmem, size = 0x10000, scoped, tag = 'scratch operand']
  %s0 = inlined_call_operand.hbm [shape: f32[128,128], index: 0, kind: input, shape index: {}]
  %s1 = inlined_call_operand.hbm [shape: f32[128,128], index: 1, kind: input, shape index: {}]
  %s2 = inlined_call_operand.hbm [shape: f32[128,128], index: 2, kind: output, shape index: {}]
  %s3 = sld [smem:[#allocation0]]
  $region34: #{tpu_custom_call.1} parent=0
    _
  %s5 = ssub.s32 1, %s3
  %s6 = scalar_select 0, %s5, %s3
  $region1: #{tpu_custom_call.1} parent=0
    #allocation3 [shape = 'u8[65536]{0}', space=vmem, size = 0x10000, scoped, tag = 'input window, operand 0, single buffered']
    #allocation4 [shape = 's32[1]{0}', space=sflag, size = 0x4, scoped, tag = 'scoped memory for tpu_custom_call.1']
    #allocation5 [shape = 's32[1]{0}', space=sflag, size = 0x4, scoped, tag = 'scoped memory for tpu_custom_call.1']
    #allocation6 [shape = 'u8[65536]{0}', space=vmem, size = 0x10000, scoped, tag = 'input window, operand 1, single buffered']
    #allocation7 [shape = 's32[1]{0}', space=sflag, size = 0x4, scoped, tag = 'scoped memory for tpu_custom_call.1']
    #allocation8 [shape = 'u8[65536]{0}', space=vmem, size = 0x10000, scoped, tag = 'output window, operand 0, single buffered']
    %7 = vsyncpa [#allocation4], 0
    %8 = vsyncpa [#allocation7], 0
    %9 = vsyncpa [#allocation5], 0
    // Predicated region
    $region2: #{tpu_custom_call.1} parent=1 // pred_check
      _
    $region3: #{tpu_custom_call.1} parent=1 // pred_check_branch
      %11 = sbr.rel (0) target = $region5
    $region4: #{tpu_custom_call.1} parent=1 // pred_region
      %13 = vsyncadd [#allocation4], 0
      %s14 = sshll.u32 %s0, 4
      %s15 = int_to_ptr.hbm [resolvable:$true] %s14
      %s16 = sshll.u32 [#allocation3], 4
      %s17 = int_to_ptr.vmem [resolvable:$true] %s16
      %22 = dma.hbm_to_vmem [thread:$0]  %s15, 2048, %s17, [#allocation4], 128, 128, 8
    $region5: #{tpu_custom_call.1} parent=1 // pred_fallthru
      _
    // Predicated region
    $region6: #{tpu_custom_call.1} parent=1 // pred_check
      _
    $region7: #{tpu_custom_call.1} parent=1 // pred_check_branch
      %24 = sbr.rel (0) target = $region9
    $region8: #{tpu_custom_call.1} parent=1 // pred_region
      %26 = vsyncadd [#allocation7], 0
      %s27 = sshll.u32 %s1, 4
      %s28 = int_to_ptr.hbm [resolvable:$true] %s27
      %s29 = sshll.u32 [#allocation6], 4
      %s30 = int_to_ptr.vmem [resolvable:$true] %s29
      %35 = dma.hbm_to_vmem [thread:$0]  %s28, 2048, %s30, [#allocation7], 128, 128, 8
    $region9: #{tpu_custom_call.1} parent=1 // pred_fallthru
      _
    // Predicated region
    $region10: #{tpu_custom_call.1} parent=1 // pred_check
      _
    $region11: #{tpu_custom_call.1} parent=1 // pred_check_branch
      %37 = sbr.rel (0) target = $region13
    $region12: #{tpu_custom_call.1} parent=1 // pred_region
      %39 = dma.done [#allocation4], 2048
    $region13: #{tpu_custom_call.1} parent=1 // pred_fallthru
      _
    // Predicated region
    $region14: #{tpu_custom_call.1} parent=1 // pred_check
      _
    $region15: #{tpu_custom_call.1} parent=1 // pred_check_branch
      %41 = sbr.rel (0) target = $region17
    $region16: #{tpu_custom_call.1} parent=1 // pred_region
      %43 = dma.done [#allocation7], 2048
    $region17: #{tpu_custom_call.1} parent=1 // pred_fallthru
      _
    %p44 = scmp.eq.s32.totalorder 0, 0
    // Predicated region
    $region18: #{tpu_custom_call.1} parent=1 // pred_check
      %p45 = pneg %p44
    $region19: #{tpu_custom_call.1} parent=1 // pred_check_branch
      %47 = sbr.rel (%p45) target = $region21
    $region20: #{tpu_custom_call.1} parent=1 // pred_region
      %48 = vst [vmem:[#allocation2] sm:$0xff] 0.0
      %49 = vst [vmem:[#allocation2 + $0x8] sm:$0xff] 0.0
      %50 = vst [vmem:[#allocation2 + $0x10] sm:$0xff] 0.0
      %51 = vst [vmem:[#allocation2 + $0x18] sm:$0xff] 0.0
      %52 = vst [vmem:[#allocation2 + $0x20] sm:$0xff] 0.0
      %53 = vst [vmem:[#allocation2 + $0x28] sm:$0xff] 0.0
      %54 = vst [vmem:[#allocation2 + $0x30] sm:$0xff] 0.0
      %55 = vst [vmem:[#allocation2 + $0x38] sm:$0xff] 0.0
      %56 = vst [vmem:[#allocation2 + $0x40] sm:$0xff] 0.0
      %57 = vst [vmem:[#allocation2 + $0x48] sm:$0xff] 0.0
      %58 = vst [vmem:[#allocation2 + $0x50] sm:$0xff] 0.0
      %59 = vst [vmem:[#allocation2 + $0x58] sm:$0xff] 0.0
      %60 = vst [vmem:[#allocation2 + $0x60] sm:$0xff] 0.0
      %61 = vst [vmem:[#allocation2 + $0x68] sm:$0xff] 0.0
      %62 = vst [vmem:[#allocation2 + $0x70] sm:$0xff] 0.0
      %63 = vst [vmem:[#allocation2 + $0x78] sm:$0xff] 0.0
    $region21: #{tpu_custom_call.1} parent=1 // pred_fallthru
      _
    %v64 = vld [vmem:[#allocation2] sm:$0xff]
    %v65 = vld [vmem:[#allocation2 + $0x8] sm:$0xff]
    %v66 = vld [vmem:[#allocation2 + $0x10] sm:$0xff]
    %v67 = vld [vmem:[#allocation2 + $0x18] sm:$0xff]
    %v68 = vld [vmem:[#allocation2 + $0x20] sm:$0xff]
    %v69 = vld [vmem:[#allocation2 + $0x28] sm:$0xff]
    %v70 = vld [vmem:[#allocation2 + $0x30] sm:$0xff]
    %v71 = vld [vmem:[#allocation2 + $0x38] sm:$0xff]
    %v72 = vld [vmem:[#allocation2 + $0x40] sm:$0xff]
    %v73 = vld [vmem:[#allocation2 + $0x48] sm:$0xff]
    %v74 = vld [vmem:[#allocation2 + $0x50] sm:$0xff]
    %v75 = vld [vmem:[#allocation2 + $0x58] sm:$0xff]
    %v76 = vld [vmem:[#allocation2 + $0x60] sm:$0xff]
    %v77 = vld [vmem:[#allocation2 + $0x68] sm:$0xff]
    %v78 = vld [vmem:[#allocation2 + $0x70] sm:$0xff]
    %v79 = vld [vmem:[#allocation2 + $0x78] sm:$0xff]
    %v80 = vld [vmem:[#allocation3] sm:$0xff]
    %v81 = vld [vmem:[#allocation3 + $0x8] sm:$0xff]
    %v82 = vld [vmem:[#allocation3 + $0x10] sm:$0xff]
    %v83 = vld [vmem:[#allocation3 + $0x18] sm:$0xff]
    %v84 = vld [vmem:[#allocation3 + $0x20] sm:$0xff]
    %v85 = vld [vmem:[#allocation3 + $0x28] sm:$0xff]
    %v86 = vld [vmem:[#allocation3 + $0x30] sm:$0xff]
    %v87 = vld [vmem:[#allocation3 + $0x38] sm:$0xff]
    %v88 = vld [vmem:[#allocation3 + $0x40] sm:$0xff]
    %v89 = vld [vmem:[#allocation3 + $0x48] sm:$0xff]
    %v90 = vld [vmem:[#allocation3 + $0x50] sm:$0xff]
    %v91 = vld [vmem:[#allocation3 + $0x58] sm:$0xff]
    %v92 = vld [vmem:[#allocation3 + $0x60] sm:$0xff]
    %v93 = vld [vmem:[#allocation3 + $0x68] sm:$0xff]
    %v94 = vld [vmem:[#allocation3 + $0x70] sm:$0xff]
    %v95 = vld [vmem:[#allocation3 + $0x78] sm:$0xff]
    %v96 = vld [vmem:[#allocation6] sm:$0xff]
    %v97 = vld [vmem:[#allocation6 + $0x8] sm:$0xff]
    %v98 = vld [vmem:[#allocation6 + $0x10] sm:$0xff]
    %v99 = vld [vmem:[#allocation6 + $0x18] sm:$0xff]
    %v100 = vld [vmem:[#allocation6 + $0x20] sm:$0xff]
    %v101 = vld [vmem:[#allocation6 + $0x28] sm:$0xff]
    %v102 = vld [vmem:[#allocation6 + $0x30] sm:$0xff]
    %v103 = vld [vmem:[#allocation6 + $0x38] sm:$0xff]
    %v104 = vld [vmem:[#allocation6 + $0x40] sm:$0xff]
    %v105 = vld [vmem:[#allocation6 + $0x48] sm:$0xff]
    %v106 = vld [vmem:[#allocation6 + $0x50] sm:$0xff]
    %v107 = vld [vmem:[#allocation6 + $0x58] sm:$0xff]
    %v108 = vld [vmem:[#allocation6 + $0x60] sm:$0xff]
    %v109 = vld [vmem:[#allocation6 + $0x68] sm:$0xff]
    %v110 = vld [vmem:[#allocation6 + $0x70] sm:$0xff]
    %v111 = vld [vmem:[#allocation6 + $0x78] sm:$0xff]
    %112 = vmatpush.msra.mxu0 %v111
    %113 = vmatpush.msra.mxu0 %v110
    %114 = vmatpush.msra.mxu0 %v109
    %115 = vmatpush.msra.mxu0 %v108
    %116 = vmatpush.msra.mxu0 %v107
    %117 = vmatpush.msra.mxu0 %v106
    %118 = vmatpush.msra.mxu0 %v105
    %119 = vmatpush.msra.mxu0 %v104
    %120 = vmatpush.msra.mxu0 %v103
    %121 = vmatpush.msra.mxu0 %v102
    %122 = vmatpush.msra.mxu0 %v101
    %123 = vmatpush.msra.mxu0 %v100
    %124 = vmatpush.msra.mxu0 %v99
    %125 = vmatpush.msra.mxu0 %v98
    %126 = vmatpush.msra.mxu0 %v97
    %127 = vmatpush.msra.mxu0 %v96
    %128 = vmatmul.f32.gmra.mxu0 %v80
    %v129 = vpop.f32.mrf.mxu0
    %v130 = vadd.f32 0.0, %v129
    %131 = vmatmul.f32.gmra.mxu0 %v81
    %v132 = vpop.f32.mrf.mxu0
    %v133 = vadd.f32 0.0, %v132
    %134 = vmatmul.f32.gmra.mxu0 %v82
    %v135 = vpop.f32.mrf.mxu0
    %v136 = vadd.f32 0.0, %v135
    %137 = vmatmul.f32.gmra.mxu0 %v83
    %v138 = vpop.f32.mrf.mxu0
    %v139 = vadd.f32 0.0, %v138
    %140 = vmatmul.f32.gmra.mxu0 %v84
    %v141 = vpop.f32.mrf.mxu0
    %v142 = vadd.f32 0.0, %v141
    %143 = vmatmul.f32.gmra.mxu0 %v85
    %v144 = vpop.f32.mrf.mxu0
    %v145 = vadd.f32 0.0, %v144
    %146 = vmatmul.f32.gmra.mxu0 %v86
    %v147 = vpop.f32.mrf.mxu0
    %v148 = vadd.f32 0.0, %v147
    %149 = vmatmul.f32.gmra.mxu0 %v87
    %v150 = vpop.f32.mrf.mxu0
    %v151 = vadd.f32 0.0, %v150
    %152 = vmatmul.f32.gmra.mxu0 %v88
    %v153 = vpop.f32.mrf.mxu0
    %v154 = vadd.f32 0.0, %v153
    %155 = vmatmul.f32.gmra.mxu0 %v89
    %v156 = vpop.f32.mrf.mxu0
    %v157 = vadd.f32 0.0, %v156
    %158 = vmatmul.f32.gmra.mxu0 %v90
    %v159 = vpop.f32.mrf.mxu0
    %v160 = vadd.f32 0.0, %v159
    %161 = vmatmul.f32.gmra.mxu0 %v91
    %v162 = vpop.f32.mrf.mxu0
    %v163 = vadd.f32 0.0, %v162
    %164 = vmatmul.f32.gmra.mxu0 %v92
    %v165 = vpop.f32.mrf.mxu0
    %v166 = vadd.f32 0.0, %v165
    %167 = vmatmul.f32.gmra.mxu0 %v93
    %v168 = vpop.f32.mrf.mxu0
    %v169 = vadd.f32 0.0, %v168
    %170 = vmatmul.f32.gmra.mxu0 %v94
    %v171 = vpop.f32.mrf.mxu0
    %v172 = vadd.f32 0.0, %v171
    %173 = vmatmul.f32.gmra.mxu0 %v95
    %v174 = vpop.f32.mrf.mxu0
    %v175 = vadd.f32 0.0, %v174
    %176 = vdwg.mxu0
    %v177 = vadd.f32 %v64, %v130
    %v178 = vadd.f32 %v65, %v133
    %v179 = vadd.f32 %v66, %v136
    %v180 = vadd.f32 %v67, %v139
    %v181 = vadd.f32 %v68, %v142
    %v182 = vadd.f32 %v69, %v145
    %v183 = vadd.f32 %v70, %v148
    %v184 = vadd.f32 %v71, %v151
    %v185 = vadd.f32 %v72, %v154
    %v186 = vadd.f32 %v73, %v157
    %v187 = vadd.f32 %v74, %v160
    %v188 = vadd.f32 %v75, %v163
    %v189 = vadd.f32 %v76, %v166
    %v190 = vadd.f32 %v77, %v169
    %v191 = vadd.f32 %v78, %v172
    %v192 = vadd.f32 %v79, %v175
    %193 = vst [vmem:[#allocation2] sm:$0xff] %v177
    %194 = vst [vmem:[#allocation2 + $0x8] sm:$0xff] %v178
    %195 = vst [vmem:[#allocation2 + $0x10] sm:$0xff] %v179
    %196 = vst [vmem:[#allocation2 + $0x18] sm:$0xff] %v180
    %197 = vst [vmem:[#allocation2 + $0x20] sm:$0xff] %v181
    %198 = vst [vmem:[#allocation2 + $0x28] sm:$0xff] %v182
    %199 = vst [vmem:[#allocation2 + $0x30] sm:$0xff] %v183
    %200 = vst [vmem:[#allocation2 + $0x38] sm:$0xff] %v184
    %201 = vst [vmem:[#allocation2 + $0x40] sm:$0xff] %v185
    %202 = vst [vmem:[#allocation2 + $0x48] sm:$0xff] %v186
    %203 = vst [vmem:[#allocation2 + $0x50] sm:$0xff] %v187
    %204 = vst [vmem:[#allocation2 + $0x58] sm:$0xff] %v188
    %205 = vst [vmem:[#allocation2 + $0x60] sm:$0xff] %v189
    %206 = vst [vmem:[#allocation2 + $0x68] sm:$0xff] %v190
    %207 = vst [vmem:[#allocation2 + $0x70] sm:$0xff] %v191
    %208 = vst [vmem:[#allocation2 + $0x78] sm:$0xff] %v192
    // Predicated region
    $region22: #{tpu_custom_call.1} parent=1 // pred_check
      %p209 = pneg %p44
    $region23: #{tpu_custom_call.1} parent=1 // pred_check_branch
      %211 = sbr.rel (%p209) target = $region25
    $region24: #{tpu_custom_call.1} parent=1 // pred_region
      %v212 = vld [vmem:[#allocation2] sm:$0xff]
      %v213 = vld [vmem:[#allocation2 + $0x8] sm:$0xff]
      %v214 = vld [vmem:[#allocation2 + $0x10] sm:$0xff]
      %v215 = vld [vmem:[#allocation2 + $0x18] sm:$0xff]
      %v216 = vld [vmem:[#allocation2 + $0x20] sm:$0xff]
      %v217 = vld [vmem:[#allocation2 + $0x28] sm:$0xff]
      %v218 = vld [vmem:[#allocation2 + $0x30] sm:$0xff]
      %v219 = vld [vmem:[#allocation2 + $0x38] sm:$0xff]
      %v220 = vld [vmem:[#allocation2 + $0x40] sm:$0xff]
      %v221 = vld [vmem:[#allocation2 + $0x48] sm:$0xff]
      %v222 = vld [vmem:[#allocation2 + $0x50] sm:$0xff]
      %v223 = vld [vmem:[#allocation2 + $0x58] sm:$0xff]
      %v224 = vld [vmem:[#allocation2 + $0x60] sm:$0xff]
      %v225 = vld [vmem:[#allocation2 + $0x68] sm:$0xff]
      %v226 = vld [vmem:[#allocation2 + $0x70] sm:$0xff]
      %v227 = vld [vmem:[#allocation2 + $0x78] sm:$0xff]
      %228 = vst [vmem:[#allocation8] sm:$0xff] %v212
      %229 = vst [vmem:[#allocation8 + $0x8] sm:$0xff] %v213
      %230 = vst [vmem:[#allocation8 + $0x10] sm:$0xff] %v214
      %231 = vst [vmem:[#allocation8 + $0x18] sm:$0xff] %v215
      %232 = vst [vmem:[#allocation8 + $0x20] sm:$0xff] %v216
      %233 = vst [vmem:[#allocation8 + $0x28] sm:$0xff] %v217
      %234 = vst [vmem:[#allocation8 + $0x30] sm:$0xff] %v218
      %235 = vst [vmem:[#allocation8 + $0x38] sm:$0xff] %v219
      %236 = vst [vmem:[#allocation8 + $0x40] sm:$0xff] %v220
      %237 = vst [vmem:[#allocation8 + $0x48] sm:$0xff] %v221
      %238 = vst [vmem:[#allocation8 + $0x50] sm:$0xff] %v222
      %239 = vst [vmem:[#allocation8 + $0x58] sm:$0xff] %v223
      %240 = vst [vmem:[#allocation8 + $0x60] sm:$0xff] %v224
      %241 = vst [vmem:[#allocation8 + $0x68] sm:$0xff] %v225
      %242 = vst [vmem:[#allocation8 + $0x70] sm:$0xff] %v226
      %243 = vst [vmem:[#allocation8 + $0x78] sm:$0xff] %v227
    $region25: #{tpu_custom_call.1} parent=1 // pred_fallthru
      _
    // Predicated region
    $region26: #{tpu_custom_call.1} parent=1 // pred_check
      _
    $region27: #{tpu_custom_call.1} parent=1 // pred_check_branch
      %245 = sbr.rel (0) target = $region29
    $region28: #{tpu_custom_call.1} parent=1 // pred_region
      %247 = vsyncadd [#allocation5], 0
      %s248 = sshll.u32 [#allocation8], 4
      %s249 = int_to_ptr.vmem [resolvable:$true] %s248
      %s250 = sshll.u32 %s2, 4
      %s251 = int_to_ptr.hbm [resolvable:$true] %s250
      %256 = dma.vmem_to_hbm [thread:$0]  %s249, 2048, %s251, [#allocation5], 128, 128, 8
    $region29: #{tpu_custom_call.1} parent=1 // pred_fallthru
      _
    // Predicated region
    $region30: #{tpu_custom_call.1} parent=1 // pred_check
      _
    $region31: #{tpu_custom_call.1} parent=1 // pred_check_branch
      %258 = sbr.rel (0) target = $region33
    $region32: #{tpu_custom_call.1} parent=1 // pred_region
      %260 = dma.done [#allocation5], 2048
    $region33: #{tpu_custom_call.1} parent=1 // pred_fallthru
      _
    %261 = vsyncpa [#allocation4], 1
    %262 = vsyncpa [#allocation7], 1
    %263 = vsyncpa [#allocation5], 1

</llo_original>
